<compile_context>
chip_gen: v7x
topology: tpu7x:2x2x1
jax: 0.10.0
libtpu: 0.0.40
codegen_flags: <defaults>
</compile_context>

<pallas_src>
import jax
import jax.numpy as jnp
from jax.experimental import pallas as pl
from jax.experimental.pallas import tpu as pltpu

NUM_FEATURES = 13   # len(X_features)
H1, H2, H3 = 50, 35, 1


def _round_up(v, m):
    return ((v + m - 1) // m) * m


def mlp_kernel(xT_ref, w1_ref, b1_ref, w2_ref, b2_ref, w3_ref, b3_ref, o_ref):
    # xT_ref: (F, TILE_B) f32, batch on lanes.  Cast to the weight dtype (bf16) for the MXU.
    x = xT_ref[...].astype(w1_ref.dtype)

    # Layer 1: (H1, F) @ (F, TILE_B) -> f32 accumulate, + bias (f32), tanh on EUP (f32).
    h = jnp.dot(w1_ref[...], x, preferred_element_type=jnp.float32) + b1_ref[...]
    h = jnp.tanh(h)                                             # (H1, TILE_B) f32

    # Layer 2: (H2, H1) @ (H1, TILE_B) -> f32 accumulate, + bias, tanh.
    h = jnp.dot(w2_ref[...], h.astype(w2_ref.dtype),
                preferred_element_type=jnp.float32) + b2_ref[...]
    h = jnp.tanh(h)                                             # (H2, TILE_B) f32

    # Layer 3: 35 -> 1 as VPU multiply + sublane (XLU) reduce (cheaper than a 1-useful-column
    # MXU pass); all f32.  w3_ref: (H2, 1) broadcasts over lanes.
    o = jnp.sum(w3_ref[...] * h, axis=0, keepdims=True) + b3_ref[...]
    o_ref[...] = o.astype(o_ref.dtype)


def mlp_forward_xt(xT, params, tile_b=4096):
    """xT: (F, B) float32 (batch-on-lanes) -> (B,) float32.  No padding / copies of x."""
    w1, b1, w2, b2, w3, b3 = params
    F, B = xT.shape
    assert F == NUM_FEATURES

    # Lane constraint: the batch tile must be a multiple of 128.
    tile_b = max(128, _round_up(int(tile_b), 128))
    # v7x: keep >=2 grid steps when possible so "parallel" shards across both TensorCores.
    if B > 128:
        tile_b = min(tile_b, max(128, _round_up(pl.cdiv(B, 2), 128)))
    # Never larger than the (128-rounded) batch.
    tile_b = min(tile_b, _round_up(B, 128))

    grid = (pl.cdiv(B, tile_b),)
    const = lambda shape: pl.BlockSpec(shape, lambda i: (0, 0))  # resident across grid steps

    out = pl.pallas_call(
        mlp_kernel,
        out_shape=jax.ShapeDtypeStruct((1, B), jnp.float32),
        grid=grid,
        in_specs=[
            pl.BlockSpec((NUM_FEATURES, tile_b), lambda i: (0, i)),  # x tile, pipelined
            const((H1, NUM_FEATURES)),   # w1 (bf16)
            const((H1, 1)),              # b1 (f32)
            const((H2, H1)),             # w2 (bf16)
            const((H2, 1)),              # b2 (f32)
            const((H2, H3)),             # w3 stored as (35, 1) f32
            const((H3, 1)),              # b3 (f32)
        ],
        out_specs=pl.BlockSpec((1, tile_b), lambda i: (0, i)),       # lane-dense output slab
        compiler_params=pltpu.CompilerParams(
            dimension_semantics=("parallel",),
        ),
    )(xT, w1, b1, w2, b2, w3, b3)

    return out[0]  # == o.view(-1)


def mlp_forward(x, params, tile_b=4096):
    """Drop-in (B, F) entry point matching the PyTorch module.  Prefer producing x as (F, B)
    upstream (or fusing the transpose into the producer) and calling mlp_forward_xt directly."""
    return mlp_forward_xt(jnp.asarray(x).T, params, tile_b=tile_b)


def init_params(key):
    """PyTorch-style nn.Linear init (U[-1/sqrt(fan_in), 1/sqrt(fan_in)]), f32, kernel layout:
    w as (fan_out, fan_in), bias as (fan_out, 1), except w3 stored as (H2, 1)."""
    def linear(key, fan_in, fan_out):
        kw, kb = jax.random.split(key)
        bound = 1.0 / jnp.sqrt(float(fan_in))
        w = jax.random.uniform(kw, (fan_out, fan_in), jnp.float32, -bound, bound)
        b = jax.random.uniform(kb, (fan_out, 1), jnp.float32, -bound, bound)
        return w, b

    k1, k2, k3 = jax.random.split(key, 3)
    w1, b1 = linear(k1, NUM_FEATURES, H1)
    w2, b2 = linear(k2, H1, H2)
    w3, b3 = linear(k3, H2, H3)
    return w1, b1, w2, b2, w3.T, b3  # w3 -> (H2, 1)


def prepare_params(params, mxu_dtype=jnp.bfloat16):
    """Pre-store the two MXU weight matrices in bf16 (accumulation stays f32 in-kernel)."""
    w1, b1, w2, b2, w3, b3 = params
    return (w1.astype(mxu_dtype), b1, w2.astype(mxu_dtype), b2, w3, b3)


def reference_forward(x, params):
    """Pure-JAX reference; mirrors the kernel's operand dtypes (bf16 or f32 weights)."""
    w1, b1, w2, b2, w3, b3 = params
    h = jnp.tanh(jnp.dot(x.astype(w1.dtype), w1.T, preferred_element_type=jnp.float32) + b1.T)
    h = jnp.tanh(jnp.dot(h.astype(w2.dtype), w2.T, preferred_element_type=jnp.float32) + b2.T)
    o = jnp.dot(h, w3, preferred_element_type=jnp.float32) + b3.T
    return o.reshape(-1)


if __name__ == "__main__":
    key = jax.random.PRNGKey(0)
    kx, kp = jax.random.split(key)

    B = 8
    x = jax.random.normal(kx, (B, NUM_FEATURES), jnp.float32)

    params_f32 = init_params(kp)
    params = prepare_params(params_f32)           # bf16 MXU weights, f32 biases / layer-3

    y = mlp_forward(x, params)
    y = jax.block_until_ready(y)
    assert y.shape == (B,)

    # Parity against a reference using the same bf16-operand / f32-accumulate numerics.
    y_ref = reference_forward(x, params)
    assert jnp.allclose(y, y_ref, atol=1e-4, rtol=1e-4), (y, y_ref)

    # Sanity against the pure-f32 reference (bf16 MXU inputs cost ~1e-3 abs error here).
    y_ref_f32 = reference_forward(x, params_f32)
    assert jnp.allclose(y, y_ref_f32, atol=5e-2, rtol=5e-2), (y, y_ref_f32)

    print("KERNEL_OK")
</pallas_src>

<mosaic_0001>
module attributes {stable_mosaic.version = 11 : i64} {
  func.func @mlp_kernel(%arg0: i32, %arg1: memref<13x128xf32, #tpu.memory_space<vmem>>, %arg2: memref<50x13xbf16, #tpu.memory_space<vmem>>, %arg3: memref<50x1xf32, #tpu.memory_space<vmem>>, %arg4: memref<35x50xbf16, #tpu.memory_space<vmem>>, %arg5: memref<35x1xf32, #tpu.memory_space<vmem>>, %arg6: memref<35x1xf32, #tpu.memory_space<vmem>>, %arg7: memref<1x1xf32, #tpu.memory_space<vmem>>, %arg8: memref<1x128xf32, #tpu.memory_space<vmem>>) attributes {dimension_semantics = [#tpu.dimension_semantics<parallel>], iteration_bounds = array<i64: 1>, scalar_prefetch = 0 : i64, scratch_operands = 0 : i64, tpu.core_type = #tpu.core_type<tc>, window_params = [{transform_indices = @transform_0, window_bounds = array<i64: 13, 128>}, {pipeline_mode = #tpu.pipeline_mode<synchronous>, transform_indices = @transform_1, window_bounds = array<i64: 50, 13>}, {pipeline_mode = #tpu.pipeline_mode<synchronous>, transform_indices = @transform_2, window_bounds = array<i64: 50, 1>}, {pipeline_mode = #tpu.pipeline_mode<synchronous>, transform_indices = @transform_3, window_bounds = array<i64: 35, 50>}, {pipeline_mode = #tpu.pipeline_mode<synchronous>, transform_indices = @transform_4, window_bounds = array<i64: 35, 1>}, {pipeline_mode = #tpu.pipeline_mode<synchronous>, transform_indices = @transform_5, window_bounds = array<i64: 35, 1>}, {pipeline_mode = #tpu.pipeline_mode<synchronous>, transform_indices = @transform_6, window_bounds = array<i64: 1, 1>}, {transform_indices = @transform_7, window_bounds = array<i64: 1, 128>}]} {
    %c0 = arith.constant 0 : index
    %c0_0 = arith.constant 0 : index
    %0 = vector.load %arg1[%c0, %c0_0] : memref<13x128xf32, #tpu.memory_space<vmem>>, vector<13x128xf32>
    %1 = arith.truncf %0 : vector<13x128xf32> to vector<13x128xbf16>
    %c0_1 = arith.constant 0 : index
    %c0_2 = arith.constant 0 : index
    %2 = vector.load %arg2[%c0_1, %c0_2] : memref<50x13xbf16, #tpu.memory_space<vmem>>, vector<50x13xbf16>
    %cst = arith.constant dense<0.000000e+00> : vector<50x128xf32>
    %3 = tpu.matmul %2, %1, %cst {dimension_numbers = #tpu.dot_dimension_numbers<[1], [0], [0], [1], [0, 0, 1, 1], [], []>} : vector<50x13xbf16>, vector<13x128xbf16>, vector<50x128xf32> -> vector<50x128xf32>
    %c0_3 = arith.constant 0 : index
    %c0_4 = arith.constant 0 : index
    %4 = vector.load %arg3[%c0_3, %c0_4] : memref<50x1xf32, #tpu.memory_space<vmem>>, vector<50x1xf32>
    %5 = vector.broadcast %4 : vector<50x1xf32> to vector<50x128xf32>
    %6 = arith.addf %3, %5 : vector<50x128xf32>
    %7 = math.tanh %6 : vector<50x128xf32>
    %c0_5 = arith.constant 0 : index
    %c0_6 = arith.constant 0 : index
    %8 = vector.load %arg4[%c0_5, %c0_6] : memref<35x50xbf16, #tpu.memory_space<vmem>>, vector<35x50xbf16>
    %9 = arith.truncf %7 : vector<50x128xf32> to vector<50x128xbf16>
    %cst_7 = arith.constant dense<0.000000e+00> : vector<35x128xf32>
    %10 = tpu.matmul %8, %9, %cst_7 {dimension_numbers = #tpu.dot_dimension_numbers<[1], [0], [0], [1], [0, 0, 1, 1], [], []>} : vector<35x50xbf16>, vector<50x128xbf16>, vector<35x128xf32> -> vector<35x128xf32>
    %c0_8 = arith.constant 0 : index
    %c0_9 = arith.constant 0 : index
    %11 = vector.load %arg5[%c0_8, %c0_9] : memref<35x1xf32, #tpu.memory_space<vmem>>, vector<35x1xf32>
    %12 = vector.broadcast %11 : vector<35x1xf32> to vector<35x128xf32>
    %13 = arith.addf %10, %12 : vector<35x128xf32>
    %14 = math.tanh %13 : vector<35x128xf32>
    %c0_10 = arith.constant 0 : index
    %c0_11 = arith.constant 0 : index
    %15 = vector.load %arg6[%c0_10, %c0_11] : memref<35x1xf32, #tpu.memory_space<vmem>>, vector<35x1xf32>
    %16 = vector.broadcast %15 : vector<35x1xf32> to vector<35x128xf32>
    %17 = arith.mulf %16, %14 : vector<35x128xf32>
    %cst_12 = arith.constant dense<0.000000e+00> : vector<128xf32>
    %18 = vector.multi_reduction <add>, %17, %cst_12 [0] : vector<35x128xf32> to vector<128xf32>
    %19 = vector.shape_cast %18 : vector<128xf32> to vector<1x128xf32>
    %c0_13 = arith.constant 0 : index
    %c0_14 = arith.constant 0 : index
    %20 = vector.load %arg7[%c0_13, %c0_14] : memref<1x1xf32, #tpu.memory_space<vmem>>, vector<1x1xf32>
    %21 = vector.broadcast %20 : vector<1x1xf32> to vector<1x128xf32>
    %22 = arith.addf %19, %21 : vector<1x128xf32>
    %c0_15 = arith.constant 0 : index
    %c0_16 = arith.constant 0 : index
    %23 = vector.load %arg8[%c0_15, %c0_16] : memref<1x128xf32, #tpu.memory_space<vmem>>, vector<1x128xf32>
    tpu.vector_store %arg8[%c0_15, %c0_16], %22 {strides = array<i32>} : memref<1x128xf32, #tpu.memory_space<vmem>>, vector<1x128xf32>,
    return
  }
  func.func @transform_0(%arg0: i32) -> (i32, i32) {
    %c0_i32 = arith.constant 0 : i32
    %c0_i32_0 = arith.constant 0 : i32
    return %c0_i32, %arg0 : i32, i32
  }
  func.func @transform_1(%arg0: i32) -> (i32, i32) {
    %c0_i32 = arith.constant 0 : i32
    %c0_i32_0 = arith.constant 0 : i32
    %c0_i32_1 = arith.constant 0 : i32
    return %c0_i32, %c0_i32_0 : i32, i32
  }
  func.func @transform_2(%arg0: i32) -> (i32, i32) {
    %c0_i32 = arith.constant 0 : i32
    %c0_i32_0 = arith.constant 0 : i32
    %c0_i32_1 = arith.constant 0 : i32
    return %c0_i32, %c0_i32_0 : i32, i32
  }
  func.func @transform_3(%arg0: i32) -> (i32, i32) {
    %c0_i32 = arith.constant 0 : i32
    %c0_i32_0 = arith.constant 0 : i32
    %c0_i32_1 = arith.constant 0 : i32
    return %c0_i32, %c0_i32_0 : i32, i32
  }
  func.func @transform_4(%arg0: i32) -> (i32, i32) {
    %c0_i32 = arith.constant 0 : i32
    %c0_i32_0 = arith.constant 0 : i32
    %c0_i32_1 = arith.constant 0 : i32
    return %c0_i32, %c0_i32_0 : i32, i32
  }
  func.func @transform_5(%arg0: i32) -> (i32, i32) {
    %c0_i32 = arith.constant 0 : i32
    %c0_i32_0 = arith.constant 0 : i32
    %c0_i32_1 = arith.constant 0 : i32
    return %c0_i32, %c0_i32_0 : i32, i32
  }
  func.func @transform_6(%arg0: i32) -> (i32, i32) {
    %c0_i32 = arith.constant 0 : i32
    %c0_i32_0 = arith.constant 0 : i32
    %c0_i32_1 = arith.constant 0 : i32
    return %c0_i32, %c0_i32_0 : i32, i32
  }
  func.func @transform_7(%arg0: i32) -> (i32, i32) {
    %c0_i32 = arith.constant 0 : i32
    %c0_i32_0 = arith.constant 0 : i32
    return %c0_i32, %arg0 : i32, i32
  }
}

</mosaic_0001>

<llo_original>
// kernel: tpu_custom_call.1
$region0: #{tpu_custom_call.1}
  #allocation0 [shape = 'u32[]', space=smem, size = 0x4, offset = 0x4, fixed_abs, tag = 'smem constant byte address 0x4 - core index']
  #allocation1 [shape = 'u32[144,128]{1,0:T(1,128)}', space=vmem, size = 0x12000, scoped, tag = 'internal scratch']
  #allocation2 [shape = 'f32[1,1]{1,0:T(1,128)S(1)}', space=vmem, size = 0x200, scoped, tag = 'scoped memory for tpu_custom_call.1']
  %s0 = inlined_call_operand.vmem [shape: f32[13,8], index: 0, kind: input, shape index: {}]
  %s1 = inlined_call_operand.vmem [shape: bf16[50,13], index: 1, kind: input, shape index: {}]
  %s2 = inlined_call_operand.vmem [shape: f32[50,1], index: 2, kind: input, shape index: {}]
  %s3 = inlined_call_operand.vmem [shape: bf16[35,50], index: 3, kind: input, shape index: {}]
  %s4 = inlined_call_operand.vmem [shape: f32[35,1], index: 4, kind: input, shape index: {}]
  %s5 = inlined_call_operand.vmem [shape: f32[35,1], index: 5, kind: input, shape index: {}]
  %s6 = inlined_call_operand.<no memory space> [shape: f32[1,1], index: 6, kind: input, shape index: {}]
  %s7 = inlined_call_operand.hbm [shape: f32[1,8], index: 7, kind: output, shape index: {}]
  %s8 = sld [smem:[#allocation0]]
  $region38: #{tpu_custom_call.1} parent=0
    _
  %s10 = ssub.s32 1, %s8
  %s11 = scalar_select 0, %s10, %s8
  %v12 = vstv %s6
  %13 = vst [vmem:[#allocation2] sm:$0x1] %v12
  $region1: #{tpu_custom_call.1} parent=0
    #allocation3 [shape = 'u8[512]{0}', space=vmem, size = 0x400, scoped, tag = 'output window, operand 0, single buffered']
    #allocation4 [shape = 's32[1]{0}', space=sflag, size = 0x4, scoped, tag = 'scoped memory for tpu_custom_call.1']
    %14 = vsyncpa [#allocation4], 0
    // Predicated region
    $region2: #{tpu_custom_call.1} parent=1 // pred_check
      _
    $region3: #{tpu_custom_call.1} parent=1 // pred_check_branch
      %16 = sbr.rel (0) target = $region5
    $region4: #{tpu_custom_call.1} parent=1 // pred_region
      _
    $region5: #{tpu_custom_call.1} parent=1 // pred_fallthru
      _
    // Predicated region
    $region6: #{tpu_custom_call.1} parent=1 // pred_check
      _
    $region7: #{tpu_custom_call.1} parent=1 // pred_check_branch
      %18 = sbr.rel (0) target = $region9
    $region8: #{tpu_custom_call.1} parent=1 // pred_region
      _
    $region9: #{tpu_custom_call.1} parent=1 // pred_fallthru
      _
    // Predicated region
    $region10: #{tpu_custom_call.1} parent=1 // pred_check
      _
    $region11: #{tpu_custom_call.1} parent=1 // pred_check_branch
      %20 = sbr.rel (0) target = $region13
    $region12: #{tpu_custom_call.1} parent=1 // pred_region
      _
    $region13: #{tpu_custom_call.1} parent=1 // pred_fallthru
      _
    // Predicated region
    $region14: #{tpu_custom_call.1} parent=1 // pred_check
      _
    $region15: #{tpu_custom_call.1} parent=1 // pred_check_branch
      %22 = sbr.rel (0) target = $region17
    $region16: #{tpu_custom_call.1} parent=1 // pred_region
      _
    $region17: #{tpu_custom_call.1} parent=1 // pred_fallthru
      _
    // Predicated region
    $region18: #{tpu_custom_call.1} parent=1 // pred_check
      _
    $region19: #{tpu_custom_call.1} parent=1 // pred_check_branch
      %24 = sbr.rel (0) target = $region21
    $region20: #{tpu_custom_call.1} parent=1 // pred_region
      _
    $region21: #{tpu_custom_call.1} parent=1 // pred_fallthru
      _
    // Predicated region
    $region22: #{tpu_custom_call.1} parent=1 // pred_check
      _
    $region23: #{tpu_custom_call.1} parent=1 // pred_check_branch
      %26 = sbr.rel (0) target = $region25
    $region24: #{tpu_custom_call.1} parent=1 // pred_region
      _
    $region25: #{tpu_custom_call.1} parent=1 // pred_fallthru
      _
    // Predicated region
    $region26: #{tpu_custom_call.1} parent=1 // pred_check
      _
    $region27: #{tpu_custom_call.1} parent=1 // pred_check_branch
      %28 = sbr.rel (0) target = $region29
    $region28: #{tpu_custom_call.1} parent=1 // pred_region
      _
    $region29: #{tpu_custom_call.1} parent=1 // pred_fallthru
      _
    %v30 = vld [vmem:[%s0] sm:$0xff]
    %v31 = vld [vmem:[%s0 + $0x8] sm:$0x1f]
    %v32 = vpack.c.bf16 %v31, %v30
    %v33 = vld [vmem:[%s1] sm:$0xf]
    %v34 = vld [vmem:[%s1 + $0x4] sm:$0xf]
    %v35 = vld [vmem:[%s1 + $0x8] sm:$0xf]
    %v36 = vld [vmem:[%s1 + $0xc] sm:$0xf]
    %v37 = vld [vmem:[%s1 + $0x10] sm:$0xf]
    %v38 = vld [vmem:[%s1 + $0x14] sm:$0xf]
    %v39 = vld [vmem:[%s1 + $0x18] sm:$0x1]
    %v40 = vld [vmem:[%s2] sm:$0xff]
    %v41 = vld [vmem:[%s2 + $0x8] sm:$0xff]
    %v42 = vld [vmem:[%s2 + $0x10] sm:$0xff]
    %v43 = vld [vmem:[%s2 + $0x18] sm:$0xff]
    %v44 = vld [vmem:[%s2 + $0x20] sm:$0xff]
    %v45 = vld [vmem:[%s2 + $0x28] sm:$0xff]
    %v46 = vld [vmem:[%s2 + $0x30] sm:$0x3]
    %48 = vset.pattern.permute.xlu0 0
    %49 = vperm.xlu0 %48, %v40
    %v50 = vpop.permute.xlu0 %49
    %53 = vset.pattern.permute.xlu0 0
    %54 = vperm.xlu0 %53, %v41
    %v55 = vpop.permute.xlu0 %54
    %58 = vset.pattern.permute.xlu0 0
    %59 = vperm.xlu0 %58, %v42
    %v60 = vpop.permute.xlu0 %59
    %63 = vset.pattern.permute.xlu0 0
    %64 = vperm.xlu0 %63, %v43
    %v65 = vpop.permute.xlu0 %64
    %68 = vset.pattern.permute.xlu0 0
    %69 = vperm.xlu0 %68, %v44
    %v70 = vpop.permute.xlu0 %69
    %73 = vset.pattern.permute.xlu0 0
    %74 = vperm.xlu0 %73, %v45
    %v75 = vpop.permute.xlu0 %74
    %78 = vset.pattern.permute.xlu0 0
    %79 = vperm.xlu0 %78, %v46
    %v80 = vpop.permute.xlu0 %79
    %v89 = vunpack.c.l.b16 %v33
    %v90 = vunpack.c.l.b16 %v34
    %v91 = vunpack.c.l.b16 %v35
    %v92 = vunpack.c.l.b16 %v36
    %v93 = vunpack.c.l.b16 %v37
    %v94 = vunpack.c.l.b16 %v38
    %v95 = vunpack.c.l.b16 %v39
    %v96 = vpack.c.b16 %v90, %v89
    %v97 = vpack.c.b16 %v92, %v91
    %v98 = vpack.c.b16 %v94, %v93
    %v99 = vpack.c.b16 %v95, %v95
    %vm100 = vcmask 105472
    %v102 = vsel %vm100, %v96, 0
    %v105 = vsel %vm100, %v97, 0
    %v108 = vsel %vm100, %v98, 0
    %v111 = vsel %vm100, %v99, 0
    %vm113 = vcmask 1045504
    %vm114 = vcmask 1046528
    %v115 = vsel %vm113, 4294967295, 65535
    %v116 = vsel %vm114, %v115, 0
    %v118 = vand.u32 %v32, %v116
    %120 = vmatprep.subr.bf16.mxu0 0
    %121 = vmatpush1.bf16.msra.mxu0 %v118
    %122 = vmatprep.subr.bf16.mxu0 0
    %123 = vmatpush1.bf16.msra.mxu0 0
    %124 = vmatprep.subr.bf16.mxu0 0
    %125 = vmatpush1.bf16.msra.mxu0 0
    %126 = vmatprep.subr.bf16.mxu0 0
    %127 = vmatpush1.bf16.msra.mxu0 0
    %128 = vmatprep.subr.bf16.mxu0 0
    %129 = vmatpush1.bf16.msra.mxu0 0
    %130 = vmatprep.subr.bf16.mxu0 0
    %131 = vmatpush1.bf16.msra.mxu0 0
    %132 = vmatprep.subr.bf16.mxu0 0
    %133 = vmatpush1.bf16.msra.mxu0 0
    %134 = vmatprep.subr.bf16.mxu0 0
    %135 = vmatpush1.bf16.msra.mxu0 0
    %136 = vmatprep.subr.bf16.mxu0 0
    %137 = vmatpush1.bf16.msra.mxu0 0
    %138 = vmatprep.subr.bf16.mxu0 0
    %139 = vmatpush1.bf16.msra.mxu0 0
    %140 = vmatprep.subr.bf16.mxu0 0
    %141 = vmatpush1.bf16.msra.mxu0 0
    %142 = vmatprep.subr.bf16.mxu0 0
    %143 = vmatpush1.bf16.msra.mxu0 0
    %144 = vmatprep.subr.bf16.mxu0 0
    %145 = vmatpush1.bf16.msra.mxu0 0
    %146 = vmatprep.subr.bf16.mxu0 0
    %147 = vmatpush1.bf16.msra.mxu0 0
    %148 = vmatprep.subr.bf16.mxu0 0
    %149 = vmatpush1.bf16.msra.mxu0 0
    %150 = vmatprep.subr.bf16.mxu0 0
    %151 = vmatpush1.bf16.msra.mxu0 0
    %152 = vmatprep.mubr.bf16.mxu0 0
    %153 = vmatmul.mubr.bf16.gmra.mrb[0].mxu0 %v102
    %v154 = vpop.f32.mrb[0].mxu0
    %v155 = vadd.f32 %v50, %v154
    %v156 = vpop.f32.mrb[0].mxu0
    %v157 = vpop.f32.mrb[0].mxu0
    %v158 = vadd.f32 %v55, %v157
    %v159 = vpop.f32.mrb[0].mxu0
    %160 = vmatprep.mubr.bf16.mxu0 0
    %161 = vmatmul.mubr.bf16.gmra.mrb[0].mxu0 %v105
    %v162 = vpop.f32.mrb[0].mxu0
    %v163 = vadd.f32 %v60, %v162
    %v164 = vpop.f32.mrb[0].mxu0
    %v165 = vpop.f32.mrb[0].mxu0
    %v166 = vadd.f32 %v65, %v165
    %v167 = vpop.f32.mrb[0].mxu0
    %168 = vmatprep.mubr.bf16.mxu0 0
    %169 = vmatmul.mubr.bf16.gmra.mrb[0].mxu0 %v108
    %v170 = vpop.f32.mrb[0].mxu0
    %v171 = vadd.f32 %v70, %v170
    %v172 = vpop.f32.mrb[0].mxu0
    %v173 = vpop.f32.mrb[0].mxu0
    %v174 = vadd.f32 %v75, %v173
    %v175 = vpop.f32.mrb[0].mxu0
    %176 = vmatprep.mubr.bf16.mxu0 0
    %177 = vmatmul.mubr.bf16.gmra.mrb[0].mxu0 %v111
    %v178 = vpop.f32.mrb[0].mxu0
    %v179 = vadd.f32 %v80, %v178
    %v180 = vpop.f32.mrb[0].mxu0
    %v181 = vpop.f32.mrb[0].mxu0
    %v182 = vpop.f32.mrb[0].mxu0
    %183 = vdwg.mxu0
    %v184 = vtanh.pop %v155
    %v185 = vtanh.pop %v158
    %v186 = vtanh.pop %v163
    %v187 = vtanh.pop %v166
    %v188 = vtanh.pop %v171
    %v189 = vtanh.pop %v174
    %v190 = vtanh.pop %v179
    %v191 = vld [vmem:[%s3] sm:$0xf]
    %v192 = vld [vmem:[%s3 + $0x4] sm:$0xf]
    %v193 = vld [vmem:[%s3 + $0x8] sm:$0xf]
    %v194 = vld [vmem:[%s3 + $0xc] sm:$0xf]
    %v195 = vld [vmem:[%s3 + $0x10] sm:$0x3]
    %v196 = vpack.c.bf16 %v185, %v184
    %v197 = vpack.c.bf16 %v187, %v186
    %v198 = vpack.c.bf16 %v189, %v188
    %v199 = vpack.c.bf16 %v190, %v190
    %v200 = vld [vmem:[%s4] sm:$0xff]
    %v201 = vld [vmem:[%s4 + $0x8] sm:$0xff]
    %v202 = vld [vmem:[%s4 + $0x10] sm:$0xff]
    %v203 = vld [vmem:[%s4 + $0x18] sm:$0xff]
    %v204 = vld [vmem:[%s4 + $0x20] sm:$0x7]
    %206 = vset.pattern.permute.xlu0 0
    %207 = vperm.xlu0 %206, %v200
    %v208 = vpop.permute.xlu0 %207
    %211 = vset.pattern.permute.xlu0 0
    %212 = vperm.xlu0 %211, %v201
    %v213 = vpop.permute.xlu0 %212
    %216 = vset.pattern.permute.xlu0 0
    %217 = vperm.xlu0 %216, %v202
    %v218 = vpop.permute.xlu0 %217
    %221 = vset.pattern.permute.xlu0 0
    %222 = vperm.xlu0 %221, %v203
    %v223 = vpop.permute.xlu0 %222
    %226 = vset.pattern.permute.xlu0 0
    %227 = vperm.xlu0 %226, %v204
    %v228 = vpop.permute.xlu0 %227
    %v235 = vunpack.c.l.b16 %v191
    %v236 = vunpack.c.l.b16 %v192
    %v237 = vunpack.c.l.b16 %v193
    %v238 = vunpack.c.l.b16 %v194
    %v239 = vunpack.c.l.b16 %v195
    %v240 = vpack.c.b16 %v236, %v235
    %v241 = vpack.c.b16 %v238, %v237
    %v242 = vpack.c.b16 %v239, %v239
    %vm243 = vcmask 408576
    %v245 = vsel %vm243, %v240, 0
    %v248 = vsel %vm243, %v241, 0
    %v251 = vsel %vm243, %v242, 0
    %vm253 = vcmask 1040384
    %v255 = vsel %vm253, %v199, 0
    %257 = vmatprep.subr.bf16.mxu0 0
    %258 = vmatpush1.bf16.msra.mxu0 %v196
    %259 = vmatprep.subr.bf16.mxu0 0
    %260 = vmatpush1.bf16.msra.mxu0 %v197
    %261 = vmatprep.subr.bf16.mxu0 0
    %262 = vmatpush1.bf16.msra.mxu0 %v198
    %263 = vmatprep.subr.bf16.mxu0 0
    %264 = vmatpush1.bf16.msra.mxu0 %v255
    %265 = vmatprep.subr.bf16.mxu0 0
    %266 = vmatpush1.bf16.msra.mxu0 0
    %267 = vmatprep.subr.bf16.mxu0 0
    %268 = vmatpush1.bf16.msra.mxu0 0
    %269 = vmatprep.subr.bf16.mxu0 0
    %270 = vmatpush1.bf16.msra.mxu0 0
    %271 = vmatprep.subr.bf16.mxu0 0
    %272 = vmatpush1.bf16.msra.mxu0 0
    %273 = vmatprep.subr.bf16.mxu0 0
    %274 = vmatpush1.bf16.msra.mxu0 0
    %275 = vmatprep.subr.bf16.mxu0 0
    %276 = vmatpush1.bf16.msra.mxu0 0
    %277 = vmatprep.subr.bf16.mxu0 0
    %278 = vmatpush1.bf16.msra.mxu0 0
    %279 = vmatprep.subr.bf16.mxu0 0
    %280 = vmatpush1.bf16.msra.mxu0 0
    %281 = vmatprep.subr.bf16.mxu0 0
    %282 = vmatpush1.bf16.msra.mxu0 0
    %283 = vmatprep.subr.bf16.mxu0 0
    %284 = vmatpush1.bf16.msra.mxu0 0
    %285 = vmatprep.subr.bf16.mxu0 0
    %286 = vmatpush1.bf16.msra.mxu0 0
    %287 = vmatprep.subr.bf16.mxu0 0
    %288 = vmatpush1.bf16.msra.mxu0 0
    %289 = vmatprep.mubr.bf16.mxu0 0
    %290 = vmatmul.mubr.bf16.gmra.mrb[0].mxu0 %v245
    %v291 = vpop.f32.mrb[0].mxu0
    %v292 = vadd.f32 %v208, %v291
    %v293 = vpop.f32.mrb[0].mxu0
    %v294 = vpop.f32.mrb[0].mxu0
    %v295 = vadd.f32 %v213, %v294
    %v296 = vpop.f32.mrb[0].mxu0
    %297 = vmatprep.mubr.bf16.mxu0 0
    %298 = vmatmul.mubr.bf16.gmra.mrb[0].mxu0 %v248
    %v299 = vpop.f32.mrb[0].mxu0
    %v300 = vadd.f32 %v218, %v299
    %v301 = vpop.f32.mrb[0].mxu0
    %v302 = vpop.f32.mrb[0].mxu0
    %v303 = vadd.f32 %v223, %v302
    %v304 = vpop.f32.mrb[0].mxu0
    %305 = vmatprep.mubr.bf16.mxu0 0
    %306 = vmatmul.mubr.bf16.gmra.mrb[0].mxu0 %v251
    %v307 = vpop.f32.mrb[0].mxu0
    %v308 = vadd.f32 %v228, %v307
    %v309 = vpop.f32.mrb[0].mxu0
    %v310 = vpop.f32.mrb[0].mxu0
    %v311 = vpop.f32.mrb[0].mxu0
    %312 = vdwg.mxu0
    %v313 = vtanh.pop %v292
    %v314 = vtanh.pop %v295
    %v315 = vtanh.pop %v300
    %v316 = vtanh.pop %v303
    %v317 = vtanh.pop %v308
    %v318 = vld [vmem:[%s5] sm:$0xff]
    %v319 = vld [vmem:[%s5 + $0x8] sm:$0xff]
    %v320 = vld [vmem:[%s5 + $0x10] sm:$0xff]
    %v321 = vld [vmem:[%s5 + $0x18] sm:$0xff]
    %v322 = vld [vmem:[%s5 + $0x20] sm:$0x7]
    %324 = vset.pattern.permute.xlu0 0
    %325 = vperm.xlu0 %324, %v318
    %v326 = vpop.permute.xlu0 %325
    %329 = vset.pattern.permute.xlu0 0
    %330 = vperm.xlu0 %329, %v319
    %v331 = vpop.permute.xlu0 %330
    %334 = vset.pattern.permute.xlu0 0
    %335 = vperm.xlu0 %334, %v320
    %v336 = vpop.permute.xlu0 %335
    %339 = vset.pattern.permute.xlu0 0
    %340 = vperm.xlu0 %339, %v321
    %v341 = vpop.permute.xlu0 %340
    %344 = vset.pattern.permute.xlu0 0
    %345 = vperm.xlu0 %344, %v322
    %v346 = vpop.permute.xlu0 %345
    %v348 = vmul.f32 %v326, %v313
    %v349 = vmul.f32 %v331, %v314
    %v350 = vmul.f32 %v336, %v315
    %v351 = vmul.f32 %v341, %v316
    %v352 = vmul.f32 %v346, %v317
    %v353 = vadd.f32 %v348, %v349
    %v354 = vadd.f32 %v353, %v350
    %v355 = vadd.f32 %v354, %v351
    %vm356 = vcmask 1042432
    %v357 = vsel %vm356, %v352, 0.0
    %v358 = vadd.f32 %v355, %v357
    %v359 = vrot.slane %v358, 4
    %v360 = vadd.f32 %v358, %v359
    %v361 = vrot.slane %v360, 2
    %v362 = vadd.f32 %v360, %v361
    %v363 = vrot.slane %v362, 1
    %v364 = vadd.f32 %v362, %v363
    %v365 = vld [vmem:[#allocation2] sm:$0x1]
    %367 = vset.pattern.permute.xlu0 0
    %368 = vperm.xlu0 %367, %v365
    %v369 = vpop.permute.xlu0 %368
    %v371 = vlaneseq
    %v372 = vshrl.u32 %v371, 7
    %v373 = vsub.s32 0, %v372
    %v374 = vrot.slane %v369, %v373
    %v375 = vadd.f32 %v364, %v374
    %376 = vst [vmem:[#allocation3] sm:$0x1] %v375
    // Predicated region
    $region30: #{tpu_custom_call.1} parent=1 // pred_check
      _
    $region31: #{tpu_custom_call.1} parent=1 // pred_check_branch
      %378 = sbr.rel (0) target = $region33
    $region32: #{tpu_custom_call.1} parent=1 // pred_region
      %s380 = ssub.s32 16, 16
      %381 = vsyncadd [#allocation4], %s380
      %s383 = sshll.u32 [#allocation3], 4
      %s384 = int_to_ptr.vmem [resolvable:$true] %s383
      %386 = dma.vmem_to_hbm [thread:$0]  %s384, 16, %s7, [#allocation4]
    $region33: #{tpu_custom_call.1} parent=1 // pred_fallthru
      _
    // Predicated region
    $region34: #{tpu_custom_call.1} parent=1 // pred_check
      _
    $region35: #{tpu_custom_call.1} parent=1 // pred_check_branch
      %388 = sbr.rel (0) target = $region37
    $region36: #{tpu_custom_call.1} parent=1 // pred_region
      %389 = dma.done [#allocation4], 16
    $region37: #{tpu_custom_call.1} parent=1 // pred_fallthru
      _
    %390 = vsyncpa [#allocation4], 1

</llo_original>
